<compile_context>
chip_gen: v6e
topology: v6e:2x2x1
jax: 0.10.0
libtpu: 0.0.40
codegen_flags: <defaults>
</compile_context>

<pallas_src>
import functools

import jax
import jax.numpy as jnp
from jax.experimental import pallas as pl
from jax.experimental.pallas import tpu as pltpu


def _rmsnorm_kernel(x_ref, w_ref, o_ref, *, eps, inv_d):
    # x_ref: (ROW_TILE, d) tile; w_ref: (1, d) float32, whole-array VMEM-resident
    # (not double-buffered); o_ref: (ROW_TILE, d).
    x = x_ref[...].astype(jnp.float32)
    w = w_ref[...]                                   # f32 cast hoisted to wrapper
    ss = jnp.sum(x * x, axis=-1, keepdims=True)      # (ROW_TILE, 1), f32 accumulate
    inv = jax.lax.rsqrt(ss * inv_d + eps)            # EUP rsqrt, f32
    o_ref[...] = (x * inv * w).astype(o_ref.dtype)


def _round_up(x, m):
    return ((x + m - 1) // m) * m


def _vmem_capacity_bytes():
    try:
        return int(pltpu.get_tpu_info().vmem_capacity_bytes)
    except Exception:
        return 64 * 1024 * 1024  # conservative: correct for v7x, safe on v5e/v6e


def _choose_row_tile(rows, d, in_bytes, out_bytes, vmem_cap):
    """Pick the row tile (sublane dim of the block)."""
    # Sublane packing granularity: f32 -> 8 rows/vreg, bf16 -> 16, int8/fp8 -> 32.
    pack = max(8, 32 // max(1, min(in_bytes, out_bytes)))

    if rows <= pack:
        return rows  # single block; block dim == full array dim is always legal

    # Per-row VMEM bytes: double-buffered input + output tiles PLUS the in-kernel
    # f32 upcast temporary (the uncounted temp is what bites first on v7x's
    # 64 MiB VMEM).  Budget only a quarter of physical VMEM for these.
    per_row = d * ((in_bytes + out_bytes) * 2 + 4)
    vmem_rows = max(pack, (vmem_cap // 4) // per_row)

    # Byte-based sizing: ~4 MiB per input tile amortizes the ~0.35 us per-step
    # overhead; keep tiles >= ~512 KiB so DMAs stay efficient.
    target_rows = max(pack, (4 * 1024 * 1024) // (d * in_bytes))
    floor_rows = max(pack, (512 * 1024) // (d * in_bytes))

    # Aim for >= 8 grid steps per TensorCore (16 total for v7x's 2 cores) when
    # the row count allows, so the software pipeline has work to overlap.
    steps_target = 16
    step_rows = _round_up(pl.cdiv(rows, steps_target), pack)

    row_tile = min(vmem_rows, target_rows, max(step_rows, floor_rows))
    row_tile = max(pack, (row_tile // pack) * pack)

    if row_tile >= rows:
        return rows  # single full-rows block (block dim == array dim)

    # Prefer an even grid-step count for v7x megacore load balance.
    steps = pl.cdiv(rows, row_tile)
    if steps % 2 == 1:
        alt = _round_up(pl.cdiv(rows, steps + 1), pack)
        if alt >= pack and alt < rows and pl.cdiv(rows, alt) % 2 == 0:
            row_tile = alt
    return row_tile


def rmsnorm(x, weight, eps=1e-5):
    """RMSNorm over the last axis of x, identical to the PyTorch module."""
    orig_shape = x.shape
    d = orig_shape[-1]
    x2 = x.reshape(-1, d)
    rows = x2.shape[0]

    in_bytes = x.dtype.itemsize
    out_bytes = in_bytes

    vmem_cap = _vmem_capacity_bytes()
    # TODO(synk): for very large d (pack-row tile alone exceeding the VMEM budget)
    # add a two-pass feature-axis tiling (partial sum-of-squares, then scale).
    row_tile = _choose_row_tile(rows, d, in_bytes, out_bytes, vmem_cap)
    grid = (pl.cdiv(rows, row_tile),)

    # Hoist the weight's float32 cast out of the kernel body; keep it whole-array
    # VMEM-resident (no per-step double-buffering).
    w2 = weight.astype(jnp.float32).reshape(1, d)

    # Explicit scoped-VMEM limit so the big tiles actually materialize
    # (defaults: 16 MiB on v5e, 32 MiB on v6e/v7x).  Account for the f32 temp.
    needed = row_tile * d * ((in_bytes + out_bytes) * 2 + 4) + d * 4
    vmem_limit = max(32 * 1024 * 1024, 2 * needed)
    vmem_limit = min(vmem_limit, int(vmem_cap * 0.9))
    vmem_limit = max(vmem_limit, needed)

    cost = pl.CostEstimate(
        flops=3 * rows * d,
        transcendentals=rows,
        bytes_accessed=rows * d * (in_bytes + out_bytes) + d * 4,
    )

    kernel = functools.partial(_rmsnorm_kernel, eps=float(eps), inv_d=1.0 / float(d))

    out = pl.pallas_call(
        kernel,
        out_shape=jax.ShapeDtypeStruct((rows, d), x.dtype),
        grid_spec=pltpu.PrefetchScalarGridSpec(
            num_scalar_prefetch=0,
            grid=grid,
            in_specs=[
                # Row axis: ragged last block (OOB rows dropped).  Feature axis:
                # block last dim == full d (never ragged on the lane axis).
                pl.BlockSpec((row_tile, d), lambda i: (i, 0)),
                # Weight: whole-array VMEM residency.
                pl.BlockSpec(memory_space=pltpu.MemorySpace.VMEM),
            ],
            out_specs=pl.BlockSpec((row_tile, d), lambda i: (i, 0)),
        ),
        compiler_params=pltpu.CompilerParams(
            dimension_semantics=("parallel",),
            vmem_limit_bytes=int(vmem_limit),
        ),
        cost_estimate=cost,
    )(x2, w2)

    return out.reshape(orig_shape)


def _reference(x, weight, eps):
    return x * jax.lax.rsqrt(jnp.mean(x * x, axis=-1, keepdims=True) + eps) * weight


if __name__ == "__main__":
    key = jax.random.PRNGKey(0)
    eps = 1e-5  # matches the PyTorch module default

    # Shapes implied by the module: (batch, seq, d_model) with d_model last.
    batch, seq, d_model = 2, 8, 32
    x = jax.random.normal(key, (batch, seq, d_model), dtype=jnp.float32)
    # Deterministic parameter init matching nn.Parameter(torch.ones(d_model)).
    weight = jnp.ones((d_model,), dtype=jnp.float32)

    y = rmsnorm(x, weight, eps=eps)
    y = jax.block_until_ready(y)
    ref = _reference(x, weight, eps)
    assert jnp.allclose(y, ref, atol=1e-5, rtol=1e-5), "mismatch vs reference"

    # Unaligned shape (rows not a multiple of 8, d not a multiple of 128) to
    # exercise the no-pad / full-d-block path.
    k2 = jax.random.PRNGKey(1)
    x_u = jax.random.normal(k2, (3, 7, 48), dtype=jnp.float32)
    w_u = 1.0 + 0.01 * jnp.arange(48, dtype=jnp.float32)
    y_u = jax.block_until_ready(rmsnorm(x_u, w_u, eps=eps))
    ref_u = _reference(x_u, w_u, eps)
    assert jnp.allclose(y_u, ref_u, atol=1e-5, rtol=1e-5), "mismatch (unaligned)"

    print("KERNEL_OK")
</pallas_src>

<mosaic_0001>
module attributes {stable_mosaic.version = 11 : i64} {
  func.func @_rmsnorm_kernel(%arg0: i32, %arg1: memref<16x32xf32, #tpu.memory_space<vmem>>, %arg2: memref<1x32xf32, #tpu.memory_space<vmem>>, %arg3: memref<16x32xf32, #tpu.memory_space<vmem>>) attributes {dimension_semantics = [#tpu.dimension_semantics<parallel>], iteration_bounds = array<i64: 1>, scalar_prefetch = 0 : i64, scratch_operands = 0 : i64, tpu.core_type = #tpu.core_type<tc>, window_params = [{transform_indices = @transform_0, window_bounds = array<i64: 16, 32>}, {pipeline_mode = #tpu.pipeline_mode<synchronous>, transform_indices = @transform_1, window_bounds = array<i64: 1, 32>}, {transform_indices = @transform_2, window_bounds = array<i64: 16, 32>}]} {
    %c0 = arith.constant 0 : index
    %c0_0 = arith.constant 0 : index
    %0 = vector.load %arg1[%c0, %c0_0] : memref<16x32xf32, #tpu.memory_space<vmem>>, vector<16x32xf32>
    %c0_1 = arith.constant 0 : index
    %c0_2 = arith.constant 0 : index
    %1 = vector.load %arg2[%c0_1, %c0_2] : memref<1x32xf32, #tpu.memory_space<vmem>>, vector<1x32xf32>
    %2 = arith.mulf %0, %0 : vector<16x32xf32>
    %cst = arith.constant dense<0.000000e+00> : vector<16xf32>
    %3 = vector.multi_reduction <add>, %2, %cst [1] : vector<16x32xf32> to vector<16xf32>
    %4 = vector.shape_cast %3 : vector<16xf32> to vector<16x1xf32>
    %cst_3 = arith.constant 3.125000e-02 : f32
    %5 = vector.broadcast %cst_3 : f32 to vector<16x1xf32>
    %6 = arith.mulf %4, %5 : vector<16x1xf32>
    %cst_4 = arith.constant 9.99999974E-6 : f32
    %7 = vector.broadcast %cst_4 : f32 to vector<16x1xf32>
    %8 = arith.addf %6, %7 : vector<16x1xf32>
    %9 = math.rsqrt %8 : vector<16x1xf32>
    %10 = vector.broadcast %9 : vector<16x1xf32> to vector<16x32xf32>
    %11 = arith.mulf %0, %10 : vector<16x32xf32>
    %12 = vector.broadcast %1 : vector<1x32xf32> to vector<16x32xf32>
    %13 = arith.mulf %11, %12 : vector<16x32xf32>
    %c0_5 = arith.constant 0 : index
    %c0_6 = arith.constant 0 : index
    %14 = vector.load %arg3[%c0_5, %c0_6] : memref<16x32xf32, #tpu.memory_space<vmem>>, vector<16x32xf32>
    tpu.vector_store %arg3[%c0_5, %c0_6], %13 {strides = array<i32>} : memref<16x32xf32, #tpu.memory_space<vmem>>, vector<16x32xf32>,
    return
  }
  func.func @transform_0(%arg0: i32) -> (i32, i32) {
    %c0_i32 = arith.constant 0 : i32
    %c0_i32_0 = arith.constant 0 : i32
    return %arg0, %c0_i32 : i32, i32
  }
  func.func @transform_1(%arg0: i32) -> (i32, i32) {
    %c0_i32 = arith.constant 0 : i32
    %c0_i32_0 = arith.constant 0 : i32
    %c0_i32_1 = arith.constant 0 : i32
    return %c0_i32, %c0_i32_0 : i32, i32
  }
  func.func @transform_2(%arg0: i32) -> (i32, i32) {
    %c0_i32 = arith.constant 0 : i32
    %c0_i32_0 = arith.constant 0 : i32
    return %arg0, %c0_i32 : i32, i32
  }
}

</mosaic_0001>

<llo_original>
// kernel: tpu_custom_call.1
$region0: #{tpu_custom_call.1}
  #allocation0 [shape = 'u32[]', space=smem, size = 0x4, offset = 0x4, fixed_abs, tag = 'smem constant byte address 0x4 - core index']
  #allocation1 [shape = 'u32[144,128]{1,0:T(1,128)}', space=vmem, size = 0x12000, scoped, tag = 'internal scratch']
  %s0 = inlined_call_operand.hbm [shape: f32[16,32], index: 0, kind: input, shape index: {}]
  %s1 = inlined_call_operand.vmem [shape: f32[1,32], index: 1, kind: input, shape index: {}]
  %s2 = inlined_call_operand.hbm [shape: f32[16,32], index: 2, kind: output, shape index: {}]
  %s3 = sld [smem:[#allocation0]]
  $region22: #{tpu_custom_call.1} parent=0
    _
  %s5 = ssub.s32 1, %s3
  %s6 = scalar_select 0, %s5, %s3
  $region1: #{tpu_custom_call.1} parent=0
    #allocation2 [shape = 'u8[8192]{0}', space=vmem, size = 0x2000, scoped, tag = 'input window, operand 0, single buffered']
    #allocation3 [shape = 's32[1]{0}', space=sflag, size = 0x4, scoped, tag = 'scoped memory for tpu_custom_call.1']
    #allocation4 [shape = 's32[1]{0}', space=sflag, size = 0x4, scoped, tag = 'scoped memory for tpu_custom_call.1']
    #allocation5 [shape = 'u8[8192]{0}', space=vmem, size = 0x2000, scoped, tag = 'output window, operand 0, single buffered']
    %7 = vsyncpa [#allocation3], 0
    %8 = vsyncpa [#allocation4], 0
    // Predicated region
    $region2: #{tpu_custom_call.1} parent=1 // pred_check
      _
    $region3: #{tpu_custom_call.1} parent=1 // pred_check_branch
      %10 = sbr.rel (0) target = $region5
    $region4: #{tpu_custom_call.1} parent=1 // pred_region
      %s12 = ssub.s32 256, 256
      %13 = vsyncadd [#allocation3], %s12
      %s14 = sshll.u32 [#allocation2], 4
      %s15 = int_to_ptr.vmem [resolvable:$true] %s14
      %20 = dma.hbm_to_vmem [thread:$0]  %s0, 256, %s15, [#allocation3], 128, 128, 8
    $region5: #{tpu_custom_call.1} parent=1 // pred_fallthru
      _
    // Predicated region
    $region6: #{tpu_custom_call.1} parent=1 // pred_check
      _
    $region7: #{tpu_custom_call.1} parent=1 // pred_check_branch
      %22 = sbr.rel (0) target = $region9
    $region8: #{tpu_custom_call.1} parent=1 // pred_region
      _
    $region9: #{tpu_custom_call.1} parent=1 // pred_fallthru
      _
    // Predicated region
    $region10: #{tpu_custom_call.1} parent=1 // pred_check
      _
    $region11: #{tpu_custom_call.1} parent=1 // pred_check_branch
      %24 = sbr.rel (0) target = $region13
    $region12: #{tpu_custom_call.1} parent=1 // pred_region
      %25 = dma.done [#allocation3], 256
    $region13: #{tpu_custom_call.1} parent=1 // pred_fallthru
      _
    %v26 = vld [vmem:[#allocation2] sm:$0xff]
    %v27 = vld [vmem:[#allocation2 + $0x8] sm:$0xff]
    %v28 = vld [vmem:[%s1] sm:$0x1]
    %v29 = vmul.f32 %v26, %v26
    %v30 = vmul.f32 %v27, %v27
    %vm31 = vcmask 261120
    %v32 = vsel %vm31, %v29, 0.0
    %33 = vadd.xlane.f32.xlu0 %v32
    %v34 = vpop.xlane.xlu0 %33
    %v35 = vsel %vm31, %v30, 0.0
    %36 = vadd.xlane.f32.xlu0 %v35
    %v37 = vpop.xlane.xlu0 %36
    %v38 = vmul.f32 %v34, 0.03125
    %v39 = vmul.f32 %v37, 0.03125
    %v40 = vadd.f32 %v38, 1e-05
    %v41 = vadd.f32 %v39, 1e-05
    %v42 = vrsqrt.pop %v40
    %v43 = vrsqrt.pop %v41
    %v44 = vmul.f32 %v26, %v42
    %v45 = vmul.f32 %v27, %v43
    %v47 = vlaneseq
    %v48 = vshrl.u32 %v47, 7
    %v49 = vsub.s32 0, %v48
    %v50 = vrot.slane %v28, %v49
    %v52 = vmul.f32 %v44, %v50
    %v53 = vmul.f32 %v45, %v50
    %54 = vst.msk [vmem:[#allocation5] sm:$0xff] %vm31, %v52
    %55 = vst.msk [vmem:[#allocation5 + $0x8] sm:$0xff] %vm31, %v53
    // Predicated region
    $region14: #{tpu_custom_call.1} parent=1 // pred_check
      _
    $region15: #{tpu_custom_call.1} parent=1 // pred_check_branch
      %57 = sbr.rel (0) target = $region17
    $region16: #{tpu_custom_call.1} parent=1 // pred_region
      %s59 = ssub.s32 256, 256
      %60 = vsyncadd [#allocation4], %s59
      %s61 = sshll.u32 [#allocation5], 4
      %s62 = int_to_ptr.vmem [resolvable:$true] %s61
      %67 = dma.vmem_to_hbm [thread:$0]  %s62, 256, %s2, [#allocation4], 128, 128, 8
    $region17: #{tpu_custom_call.1} parent=1 // pred_fallthru
      _
    // Predicated region
    $region18: #{tpu_custom_call.1} parent=1 // pred_check
      _
    $region19: #{tpu_custom_call.1} parent=1 // pred_check_branch
      %69 = sbr.rel (0) target = $region21
    $region20: #{tpu_custom_call.1} parent=1 // pred_region
      %70 = dma.done [#allocation4], 256
    $region21: #{tpu_custom_call.1} parent=1 // pred_fallthru
      _
    %71 = vsyncpa [#allocation3], 1
    %72 = vsyncpa [#allocation4], 1

</llo_original>
